<compile_context>
chip_gen: v6e
topology: v6e:2x2x1
jax: 0.10.0
libtpu: 0.0.40
codegen_flags: <defaults>
</compile_context>

<pallas_src>
import functools

import jax
import jax.numpy as jnp
from jax import lax
from jax.experimental import pallas as pl
from jax.experimental.pallas import tpu as pltpu


def _ccbn_kernel(x_ref, gain_ref, bias_ref, o_ref,
                 sum_ref, sumsq_ref, mean_ref, istd_ref,
                 *, eps, inv_n, apply_in_f32):
    # Grid: (channel block, phase, hw block)
    phase = pl.program_id(1)
    hw = pl.program_id(2)

    @pl.when(jnp.logical_and(phase == 0, hw == 0))
    def _init():
        sum_ref[...] = jnp.zeros_like(sum_ref)
        sumsq_ref[...] = jnp.zeros_like(sumsq_ref)

    @pl.when(phase == 0)
    def _accumulate():
        x = x_ref[...].astype(jnp.float32)                    # (B, Ct, HWt)
        s = jnp.sum(x, axis=2, keepdims=True)                 # lane reduce -> (B, Ct, 1)
        s2 = jnp.sum(x * x, axis=2, keepdims=True)            # (B, Ct, 1)
        sum_ref[...] += jnp.sum(s, axis=0, keepdims=True)     # (1, Ct, 1)
        sumsq_ref[...] += jnp.sum(s2, axis=0, keepdims=True)

    @pl.when(jnp.logical_and(phase == 1, hw == 0))
    def _finalize_stats():
        mean = sum_ref[...] * inv_n                           # (1, Ct, 1)
        var = sumsq_ref[...] * inv_n - mean * mean
        var = jnp.maximum(var, 0.0)                           # guard f32 cancellation
        mean_ref[...] = mean
        istd_ref[...] = lax.rsqrt(var + eps)                  # EUP slot

    @pl.when(phase == 1)
    def _apply():
        gain = gain_ref[...]                                  # (B, Ct, 1) f32
        bias = bias_ref[...]                                  # (B, Ct, 1) f32
        scale = gain * istd_ref[...]                          # (B, Ct, 1)
        shift = bias - mean_ref[...] * scale                  # (B, Ct, 1)
        x = x_ref[...]
        if apply_in_f32:
            out = x.astype(jnp.float32) * scale + shift
        else:
            # bf16 path: apply in the input dtype; scale/shift casts are tiny.
            out = x * scale.astype(x.dtype) + shift.astype(x.dtype)
        o_ref[...] = out.astype(o_ref.dtype)


def _round_up(n, m):
    return ((n + m - 1) // m) * m


def _divisor_tiles(dim, unit):
    """Divisors of `dim` that are multiples of `unit`, descending; [dim] if none."""
    if dim % unit == 0:
        return [t for t in range(dim, 0, -unit) if dim % t == 0]
    return [dim]


def _vmem_limit_bytes():
    """Scoped-VMEM limit: half of physical, capped at 64 MiB.
    (v5e/v6e: 128 MiB physical -> 64 MiB; v7x: 64 MiB physical -> 32 MiB.)"""
    phys = 128 * 1024 * 1024
    try:
        cap = getattr(pltpu.get_tpu_info(), "vmem_capacity_bytes", None)
        if cap:
            phys = int(cap)
    except Exception:
        pass
    return min(phys // 2, 64 * 1024 * 1024), phys


def _live_bytes(B, c_tile, hw_tile, itemsize):
    # 2x input + 2x output double-buffered blocks + ~2 f32 upcast temporaries,
    # plus the lane-padded (B, c_tile, 1) gain/bias blocks (double-buffered).
    x_part = B * c_tile * hw_tile * (4 * itemsize + 2 * 4)
    gb_part = 2 * 2 * B * _round_up(c_tile, 8) * 128 * 4
    return x_part + gb_part


def _choose_tiles(B, C, HW, itemsize, budget):
    """Pick (c_tile, hw_tile) under the VMEM budget, preferring a full-HW
    stripe (x read only once) and num_c >= 2 (v7x megacore)."""
    c_unit = 8 if itemsize == 4 else (16 if itemsize == 2 else 32)
    c_cands = _divisor_tiles(C, c_unit)                       # descending

    # Preferred: full-HW stripe (num_hw == 1) -> 1R + 1W of x.
    fitting = [t for t in c_cands if _live_bytes(B, t, HW, itemsize) <= budget]
    if fitting or HW % 128 != 0:
        if fitting:
            multi = [t for t in fitting if C // t >= 2]
            c_tile = multi[0] if multi else fitting[0]
        else:
            c_tile = c_cands[-1]                              # best effort
        return c_tile, HW

    # Otherwise tile HW: small channel tile, largest fitting lane-aligned hw tile.
    multi = [t for t in c_cands if C // t >= 2]
    c_tile = multi[-1] if multi else c_cands[-1]
    hw_cands = [t for t in range(HW, 127, -128) if HW % t == 0]
    hw_fit = [t for t in hw_cands if _live_bytes(B, c_tile, t, itemsize) <= budget]
    hw_tile = hw_fit[0] if hw_fit else hw_cands[-1]
    return c_tile, hw_tile


def ccbn_forward(x_nchw, y, w_gain, b_gain, w_bias, b_bias, *, eps=1e-5):
    """x_nchw: (B, C, H, W); y: (B, Din).
    w_gain/w_bias: PyTorch Linear weights of shape (C, Din); b_*: (C,).
    NOTE: the output aliases x's HBM buffer (caller should donate x)."""
    B, C, H, W = x_nchw.shape
    HW = H * W
    itemsize = jnp.dtype(x_nchw.dtype).itemsize

    # Hoisted conditional Linear layers (tiny matmuls -> plain XLA).
    gain = (1.0 + (y @ w_gain.T + b_gain)).astype(jnp.float32)   # (B, C)
    bias = (y @ w_bias.T + b_bias).astype(jnp.float32)           # (B, C)
    gain3 = gain[:, :, None]                                     # (B, C, 1)
    bias3 = bias[:, :, None]                                     # (B, C, 1)

    # Keep NCHW; merge H,W onto the lane axis (free reshape, no transpose).
    x = x_nchw.reshape(B, C, HW)

    vmem_limit, phys = _vmem_limit_bytes()
    reserve = 1 << 20                                            # stats scratch, misc
    c_tile, hw_tile = _choose_tiles(B, C, HW, itemsize, vmem_limit - reserve)

    num_c = C // c_tile
    num_hw = HW // hw_tile
    grid = (num_c, 2, num_hw)                                    # (c block, phase, hw block)

    # Make sure the scoped limit actually covers the chosen tiles (odd shapes).
    needed = _live_bytes(B, c_tile, hw_tile, itemsize) + reserve
    vmem_limit = min(max(vmem_limit, needed), int(phys * 0.9))

    kernel = functools.partial(
        _ccbn_kernel, eps=float(eps), inv_n=1.0 / float(B * HW),
        apply_in_f32=(itemsize >= 4))

    def x_index_map(c, p, h):
        # Phase 0 walks hw blocks forward, phase 1 backward (serpentine): the
        # first phase-1 block is the last phase-0 block still resident in VMEM
        # (and for num_hw == 1 the two phases share a single DMA of x).
        return (0, c, h * (1 - p) + (num_hw - 1 - h) * p)

    def out_index_map(c, p, h):
        # Phase 0 pins the output index to the block phase 1 writes first, so
        # the (unwritten) buffer is never flushed to HBM before it holds data.
        return (0, c, num_hw - 1 - h * p)

    out = pl.pallas_call(
        kernel,
        out_shape=jax.ShapeDtypeStruct((B, C, HW), x_nchw.dtype),
        grid_spec=pltpu.PrefetchScalarGridSpec(
            num_scalar_prefetch=0,
            grid=grid,
            in_specs=[
                pl.BlockSpec((B, c_tile, hw_tile), x_index_map),
                pl.BlockSpec((B, c_tile, 1), lambda c, p, h: (0, c, 0)),   # gain
                pl.BlockSpec((B, c_tile, 1), lambda c, p, h: (0, c, 0)),   # bias
            ],
            out_specs=pl.BlockSpec((B, c_tile, hw_tile), out_index_map),
            scratch_shapes=[
                pltpu.VMEM((1, c_tile, 1), jnp.float32),   # per-channel sum
                pltpu.VMEM((1, c_tile, 1), jnp.float32),   # per-channel sum of squares
                pltpu.VMEM((1, c_tile, 1), jnp.float32),   # mean
                pltpu.VMEM((1, c_tile, 1), jnp.float32),   # 1/sqrt(var + eps)
            ],
        ),
        # x's last read of each block happens in the step that writes the same
        # block, so the output can safely reuse x's HBM buffer.
        input_output_aliases={0: 0},
        compiler_params=pltpu.CompilerParams(
            dimension_semantics=("parallel", "arbitrary", "arbitrary"),
            vmem_limit_bytes=int(vmem_limit)),
    )(x, gain3, bias3)

    return out.reshape(B, C, H, W)


def ccbn_reference(x_nchw, y, w_gain, b_gain, w_bias, b_bias, *, eps=1e-5):
    """Pure-JAX reference mirroring the PyTorch forward (training mode)."""
    gain = 1.0 + (y @ w_gain.T + b_gain)          # (B, C)
    bias = y @ w_bias.T + b_bias                  # (B, C)
    xf = x_nchw.astype(jnp.float32)
    m = jnp.mean(xf, axis=(0, 2, 3), keepdims=True)
    var = jnp.mean(xf * xf, axis=(0, 2, 3), keepdims=True) - m * m
    out = (xf - m) * lax.rsqrt(var + eps)
    out = out * gain[:, :, None, None] + bias[:, :, None, None]
    return out.astype(x_nchw.dtype)


if __name__ == "__main__":
    # Small shapes: batch=2, channels=4, spatial=16x16, conditioning dim=8.
    B, C, H, W, Din = 2, 4, 16, 16, 8
    key = jax.random.PRNGKey(0)
    kx, ky, kwg, kbg, kwb, kbb = jax.random.split(key, 6)

    x = jax.random.normal(kx, (B, C, H, W), dtype=jnp.float32)
    y = jax.random.normal(ky, (B, Din), dtype=jnp.float32)
    # PyTorch Linear(input_size, output_size): weight (C, Din), bias (C,).
    w_gain = 0.05 * jax.random.normal(kwg, (C, Din), dtype=jnp.float32)
    b_gain = 0.05 * jax.random.normal(kbg, (C,), dtype=jnp.float32)
    w_bias = 0.05 * jax.random.normal(kwb, (C, Din), dtype=jnp.float32)
    b_bias = 0.05 * jax.random.normal(kbb, (C,), dtype=jnp.float32)

    # Compute the reference BEFORE the kernel: the kernel declares x as aliased
    # with its output, so x's buffer may be reused afterwards.
    ref = jax.block_until_ready(
        ccbn_reference(x, y, w_gain, b_gain, w_bias, b_bias))

    out = ccbn_forward(x, y, w_gain, b_gain, w_bias, b_bias)
    out = jax.block_until_ready(out)

    assert out.shape == (B, C, H, W)
    assert jnp.allclose(out, ref, atol=1e-4, rtol=1e-4), "mismatch vs reference"

    print("KERNEL_OK")
</pallas_src>

<mosaic_0001>
module attributes {stable_mosaic.version = 11 : i64} {
  func.func @_ccbn_kernel(%arg0: i32, %arg1: i32, %arg2: i32, %arg3: memref<2x4x256xf32, #tpu.memory_space<vmem>>, %arg4: memref<2x4x1xf32, #tpu.memory_space<vmem>>, %arg5: memref<2x4x1xf32, #tpu.memory_space<vmem>>, %arg6: memref<2x4x256xf32, #tpu.memory_space<vmem>>, %arg7: memref<1x4x1xf32, #tpu.memory_space<vmem>>, %arg8: memref<1x4x1xf32, #tpu.memory_space<vmem>>, %arg9: memref<1x4x1xf32, #tpu.memory_space<vmem>>, %arg10: memref<1x4x1xf32, #tpu.memory_space<vmem>>) attributes {dimension_semantics = [#tpu.dimension_semantics<parallel>, #tpu.dimension_semantics<arbitrary>, #tpu.dimension_semantics<arbitrary>], iteration_bounds = array<i64: 1, 2, 1>, scalar_prefetch = 0 : i64, scratch_operands = 4 : i64, tpu.core_type = #tpu.core_type<tc>, window_params = [{transform_indices = @transform_0, window_bounds = array<i64: 2, 4, 256>}, {transform_indices = @transform_1, window_bounds = array<i64: 2, 4, 1>}, {transform_indices = @transform_2, window_bounds = array<i64: 2, 4, 1>}, {transform_indices = @transform_3, window_bounds = array<i64: 2, 4, 256>}]} {
    %c0_i32 = arith.constant 0 : i32
    %0 = arith.cmpi eq, %arg1, %c0_i32 : i32
    %c0_i32_0 = arith.constant 0 : i32
    %1 = arith.cmpi eq, %arg2, %c0_i32_0 : i32
    %2 = arith.andi %0, %1 : i1
    %3 = arith.extui %2 : i1 to i32
    %c0_i32_1 = arith.constant 0 : i32
    %4 = arith.cmpi ne, %3, %c0_i32_1 : i32
    scf.if %4 {
      %cst = arith.constant 0.000000e+00 : f32
      %16 = vector.broadcast %cst : f32 to vector<1x4x1xf32>
      %c0 = arith.constant 0 : index
      %c0_8 = arith.constant 0 : index
      %c0_9 = arith.constant 0 : index
      %17 = vector.load %arg7[%c0, %c0_8, %c0_9] : memref<1x4x1xf32, #tpu.memory_space<vmem>>, vector<1x4x1xf32>
      tpu.vector_store %arg7[%c0, %c0_8, %c0_9], %16 {strides = array<i32>} : memref<1x4x1xf32, #tpu.memory_space<vmem>>, vector<1x4x1xf32>,
      %cst_10 = arith.constant 0.000000e+00 : f32
      %18 = vector.broadcast %cst_10 : f32 to vector<1x4x1xf32>
      %c0_11 = arith.constant 0 : index
      %c0_12 = arith.constant 0 : index
      %c0_13 = arith.constant 0 : index
      %19 = vector.load %arg8[%c0_11, %c0_12, %c0_13] : memref<1x4x1xf32, #tpu.memory_space<vmem>>, vector<1x4x1xf32>
      tpu.vector_store %arg8[%c0_11, %c0_12, %c0_13], %18 {strides = array<i32>} : memref<1x4x1xf32, #tpu.memory_space<vmem>>, vector<1x4x1xf32>,
    } else {
    }
    %c0_i32_2 = arith.constant 0 : i32
    %5 = arith.cmpi eq, %arg1, %c0_i32_2 : i32
    %6 = arith.extui %5 : i1 to i32
    %c0_i32_3 = arith.constant 0 : i32
    %7 = arith.cmpi ne, %6, %c0_i32_3 : i32
    scf.if %7 {
      %c0 = arith.constant 0 : index
      %c0_8 = arith.constant 0 : index
      %c0_9 = arith.constant 0 : index
      %16 = vector.load %arg3[%c0, %c0_8, %c0_9] : memref<2x4x256xf32, #tpu.memory_space<vmem>>, vector<2x4x256xf32>
      %cst = arith.constant dense<0.000000e+00> : vector<2x4xf32>
      %17 = vector.multi_reduction <add>, %16, %cst [2] : vector<2x4x256xf32> to vector<2x4xf32>
      %18 = vector.shape_cast %17 : vector<2x4xf32> to vector<2x4x1xf32>
      %19 = arith.mulf %16, %16 : vector<2x4x256xf32>
      %cst_10 = arith.constant dense<0.000000e+00> : vector<2x4xf32>
      %20 = vector.multi_reduction <add>, %19, %cst_10 [2] : vector<2x4x256xf32> to vector<2x4xf32>
      %21 = vector.shape_cast %20 : vector<2x4xf32> to vector<2x4x1xf32>
      %c0_11 = arith.constant 0 : index
      %c0_12 = arith.constant 0 : index
      %c0_13 = arith.constant 0 : index
      %22 = vector.load %arg7[%c0_11, %c0_12, %c0_13] : memref<1x4x1xf32, #tpu.memory_space<vmem>>, vector<1x4x1xf32>
      %cst_14 = arith.constant dense<0.000000e+00> : vector<4x1xf32>
      %23 = vector.multi_reduction <add>, %18, %cst_14 [0] : vector<2x4x1xf32> to vector<4x1xf32>
      %24 = vector.shape_cast %23 : vector<4x1xf32> to vector<1x4x1xf32>
      %25 = arith.addf %22, %24 : vector<1x4x1xf32>
      %c0_15 = arith.constant 0 : index
      %c0_16 = arith.constant 0 : index
      %c0_17 = arith.constant 0 : index
      %26 = vector.load %arg7[%c0_15, %c0_16, %c0_17] : memref<1x4x1xf32, #tpu.memory_space<vmem>>, vector<1x4x1xf32>
      tpu.vector_store %arg7[%c0_15, %c0_16, %c0_17], %25 {strides = array<i32>} : memref<1x4x1xf32, #tpu.memory_space<vmem>>, vector<1x4x1xf32>,
      %c0_18 = arith.constant 0 : index
      %c0_19 = arith.constant 0 : index
      %c0_20 = arith.constant 0 : index
      %27 = vector.load %arg8[%c0_18, %c0_19, %c0_20] : memref<1x4x1xf32, #tpu.memory_space<vmem>>, vector<1x4x1xf32>
      %cst_21 = arith.constant dense<0.000000e+00> : vector<4x1xf32>
      %28 = vector.multi_reduction <add>, %21, %cst_21 [0] : vector<2x4x1xf32> to vector<4x1xf32>
      %29 = vector.shape_cast %28 : vector<4x1xf32> to vector<1x4x1xf32>
      %30 = arith.addf %27, %29 : vector<1x4x1xf32>
      %c0_22 = arith.constant 0 : index
      %c0_23 = arith.constant 0 : index
      %c0_24 = arith.constant 0 : index
      %31 = vector.load %arg8[%c0_22, %c0_23, %c0_24] : memref<1x4x1xf32, #tpu.memory_space<vmem>>, vector<1x4x1xf32>
      tpu.vector_store %arg8[%c0_22, %c0_23, %c0_24], %30 {strides = array<i32>} : memref<1x4x1xf32, #tpu.memory_space<vmem>>, vector<1x4x1xf32>,
    } else {
    }
    %c1_i32 = arith.constant 1 : i32
    %8 = arith.cmpi eq, %arg1, %c1_i32 : i32
    %c0_i32_4 = arith.constant 0 : i32
    %9 = arith.cmpi eq, %arg2, %c0_i32_4 : i32
    %10 = arith.andi %8, %9 : i1
    %11 = arith.extui %10 : i1 to i32
    %c0_i32_5 = arith.constant 0 : i32
    %12 = arith.cmpi ne, %11, %c0_i32_5 : i32
    scf.if %12 {
      %c0 = arith.constant 0 : index
      %c0_8 = arith.constant 0 : index
      %c0_9 = arith.constant 0 : index
      %16 = vector.load %arg7[%c0, %c0_8, %c0_9] : memref<1x4x1xf32, #tpu.memory_space<vmem>>, vector<1x4x1xf32>
      %cst = arith.constant 0.001953125 : f32
      %17 = vector.broadcast %cst : f32 to vector<1x4x1xf32>
      %18 = arith.mulf %16, %17 : vector<1x4x1xf32>
      %c0_10 = arith.constant 0 : index
      %c0_11 = arith.constant 0 : index
      %c0_12 = arith.constant 0 : index
      %19 = vector.load %arg8[%c0_10, %c0_11, %c0_12] : memref<1x4x1xf32, #tpu.memory_space<vmem>>, vector<1x4x1xf32>
      %cst_13 = arith.constant 0.001953125 : f32
      %20 = vector.broadcast %cst_13 : f32 to vector<1x4x1xf32>
      %21 = arith.mulf %19, %20 : vector<1x4x1xf32>
      %22 = arith.mulf %18, %18 : vector<1x4x1xf32>
      %23 = arith.subf %21, %22 : vector<1x4x1xf32>
      %cst_14 = arith.constant 0.000000e+00 : f32
      %24 = vector.broadcast %cst_14 : f32 to vector<1x4x1xf32>
      %25 = arith.maximumf %23, %24 : vector<1x4x1xf32>
      %c0_15 = arith.constant 0 : index
      %c0_16 = arith.constant 0 : index
      %c0_17 = arith.constant 0 : index
      %26 = vector.load %arg9[%c0_15, %c0_16, %c0_17] : memref<1x4x1xf32, #tpu.memory_space<vmem>>, vector<1x4x1xf32>
      tpu.vector_store %arg9[%c0_15, %c0_16, %c0_17], %18 {strides = array<i32>} : memref<1x4x1xf32, #tpu.memory_space<vmem>>, vector<1x4x1xf32>,
      %cst_18 = arith.constant 9.99999974E-6 : f32
      %27 = vector.broadcast %cst_18 : f32 to vector<1x4x1xf32>
      %28 = arith.addf %25, %27 : vector<1x4x1xf32>
      %29 = math.rsqrt %28 : vector<1x4x1xf32>
      %c0_19 = arith.constant 0 : index
      %c0_20 = arith.constant 0 : index
      %c0_21 = arith.constant 0 : index
      %30 = vector.load %arg10[%c0_19, %c0_20, %c0_21] : memref<1x4x1xf32, #tpu.memory_space<vmem>>, vector<1x4x1xf32>
      tpu.vector_store %arg10[%c0_19, %c0_20, %c0_21], %29 {strides = array<i32>} : memref<1x4x1xf32, #tpu.memory_space<vmem>>, vector<1x4x1xf32>,
    } else {
    }
    %c1_i32_6 = arith.constant 1 : i32
    %13 = arith.cmpi eq, %arg1, %c1_i32_6 : i32
    %14 = arith.extui %13 : i1 to i32
    %c0_i32_7 = arith.constant 0 : i32
    %15 = arith.cmpi ne, %14, %c0_i32_7 : i32
    scf.if %15 {
      %c0 = arith.constant 0 : index
      %c0_8 = arith.constant 0 : index
      %c0_9 = arith.constant 0 : index
      %16 = vector.load %arg4[%c0, %c0_8, %c0_9] : memref<2x4x1xf32, #tpu.memory_space<vmem>>, vector<2x4x1xf32>
      %c0_10 = arith.constant 0 : index
      %c0_11 = arith.constant 0 : index
      %c0_12 = arith.constant 0 : index
      %17 = vector.load %arg5[%c0_10, %c0_11, %c0_12] : memref<2x4x1xf32, #tpu.memory_space<vmem>>, vector<2x4x1xf32>
      %c0_13 = arith.constant 0 : index
      %c0_14 = arith.constant 0 : index
      %c0_15 = arith.constant 0 : index
      %18 = vector.load %arg10[%c0_13, %c0_14, %c0_15] : memref<1x4x1xf32, #tpu.memory_space<vmem>>, vector<1x4x1xf32>
      %19 = vector.broadcast %18 : vector<1x4x1xf32> to vector<2x4x1xf32>
      %20 = arith.mulf %16, %19 : vector<2x4x1xf32>
      %c0_16 = arith.constant 0 : index
      %c0_17 = arith.constant 0 : index
      %c0_18 = arith.constant 0 : index
      %21 = vector.load %arg9[%c0_16, %c0_17, %c0_18] : memref<1x4x1xf32, #tpu.memory_space<vmem>>, vector<1x4x1xf32>
      %22 = vector.broadcast %21 : vector<1x4x1xf32> to vector<2x4x1xf32>
      %23 = arith.mulf %22, %20 : vector<2x4x1xf32>
      %24 = arith.subf %17, %23 : vector<2x4x1xf32>
      %c0_19 = arith.constant 0 : index
      %c0_20 = arith.constant 0 : index
      %c0_21 = arith.constant 0 : index
      %25 = vector.load %arg3[%c0_19, %c0_20, %c0_21] : memref<2x4x256xf32, #tpu.memory_space<vmem>>, vector<2x4x256xf32>
      %26 = vector.broadcast %20 : vector<2x4x1xf32> to vector<2x4x256xf32>
      %27 = arith.mulf %25, %26 : vector<2x4x256xf32>
      %28 = vector.broadcast %24 : vector<2x4x1xf32> to vector<2x4x256xf32>
      %29 = arith.addf %27, %28 : vector<2x4x256xf32>
      %c0_22 = arith.constant 0 : index
      %c0_23 = arith.constant 0 : index
      %c0_24 = arith.constant 0 : index
      %30 = vector.load %arg6[%c0_22, %c0_23, %c0_24] : memref<2x4x256xf32, #tpu.memory_space<vmem>>, vector<2x4x256xf32>
      tpu.vector_store %arg6[%c0_22, %c0_23, %c0_24], %29 {strides = array<i32>} : memref<2x4x256xf32, #tpu.memory_space<vmem>>, vector<2x4x256xf32>,
    } else {
    }
    return
  }
  func.func @transform_0(%arg0: i32, %arg1: i32, %arg2: i32) -> (i32, i32, i32) {
    %c1_i32 = arith.constant 1 : i32
    %0 = arith.subi %c1_i32, %arg1 : i32
    %1 = arith.muli %arg2, %0 : i32
    %c0_i32 = arith.constant 0 : i32
    %2 = arith.subi %c0_i32, %arg2 : i32
    %3 = arith.muli %2, %arg1 : i32
    %4 = arith.addi %1, %3 : i32
    %c0_i32_0 = arith.constant 0 : i32
    %c0_i32_1 = arith.constant 0 : i32
    return %c0_i32_0, %arg0, %4 : i32, i32, i32
  }
  func.func @transform_1(%arg0: i32, %arg1: i32, %arg2: i32) -> (i32, i32, i32) {
    %c0_i32 = arith.constant 0 : i32
    %c0_i32_0 = arith.constant 0 : i32
    %c0_i32_1 = arith.constant 0 : i32
    return %c0_i32, %arg0, %c0_i32_0 : i32, i32, i32
  }
  func.func @transform_2(%arg0: i32, %arg1: i32, %arg2: i32) -> (i32, i32, i32) {
    %c0_i32 = arith.constant 0 : i32
    %c0_i32_0 = arith.constant 0 : i32
    %c0_i32_1 = arith.constant 0 : i32
    return %c0_i32, %arg0, %c0_i32_0 : i32, i32, i32
  }
  func.func @transform_3(%arg0: i32, %arg1: i32, %arg2: i32) -> (i32, i32, i32) {
    %0 = arith.muli %arg2, %arg1 : i32
    %c0_i32 = arith.constant 0 : i32
    %1 = arith.subi %c0_i32, %0 : i32
    %c0_i32_0 = arith.constant 0 : i32
    %c0_i32_1 = arith.constant 0 : i32
    return %c0_i32_0, %arg0, %1 : i32, i32, i32
  }
}

</mosaic_0001>

<llo_original>
// kernel: tpu_custom_call.1
$region0: #{tpu_custom_call.1}
  #allocation0 [shape = 'u32[]', space=smem, size = 0x4, offset = 0x4, fixed_abs, tag = 'smem constant byte address 0x4 - core index']
  #allocation1 [shape = 'u32[144,128]{1,0:T(1,128)}', space=vmem, size = 0x12000, scoped, tag = 'internal scratch']
  #allocation2 [shape = 'f32[1,4,1]{2,1,0:T(4,128)}', space=vmem, size = 0x800, scoped, tag = 'scratch operand']
  #allocation3 [shape = 'f32[1,4,1]{2,1,0:T(4,128)}', space=vmem, size = 0x800, scoped, tag = 'scratch operand']
  #allocation4 [shape = 'f32[1,4,1]{2,1,0:T(4,128)}', space=vmem, size = 0x800, scoped, tag = 'scratch operand']
  #allocation5 [shape = 'f32[1,4,1]{2,1,0:T(4,128)}', space=vmem, size = 0x800, scoped, tag = 'scratch operand']
  %s0 = inlined_call_operand.hbm [shape: f32[2,4,256], index: 0, kind: input, shape index: {}, may-alias: {0,3}]
  %s1 = inlined_call_operand.vmem [shape: f32[2,4,1], index: 1, kind: input, shape index: {}]
  %s2 = inlined_call_operand.vmem [shape: f32[2,4,1], index: 2, kind: input, shape index: {}]
  %s3 = inlined_call_operand.hbm [shape: f32[2,4,256], index: 3, kind: output, shape index: {}, may-alias: {0,3}]
  %s4 = sld [smem:[#allocation0]]
  $region65: #{tpu_custom_call.1} parent=0
    _
  %s6 = ssub.s32 1, %s4
  %s7 = scalar_select 0, %s6, %s4
  $region1: #{tpu_custom_call.1} parent=0
    #allocation6 [shape = 'u8[16384]{0}', space=vmem, size = 0x4000, scoped, tag = 'input window, operand 0']
    #allocation7 [shape = 's32[2]{0}', space=sflag, size = 0x8, scoped, tag = 'scoped memory for tpu_custom_call.1']
    #allocation8 [shape = 's32[2]{0}', space=sflag, size = 0x8, scoped, tag = 'scoped memory for tpu_custom_call.1']
    #allocation9 [shape = 'u8[16384]{0}', space=vmem, size = 0x4000, scoped, tag = 'output window, operand 0']
    %8 = vsyncpa [#allocation7], 0
    %s9 = scalar_lea.sflag [#allocation7], 1
    %10 = vsyncpa %s9, 0
    %11 = vsyncpa [#allocation8], 0
    %s12 = scalar_lea.sflag [#allocation8], 1
    %13 = vsyncpa %s12, 0
    loop: start=0, step=1, limit=4
    $region2: #{tpu_custom_call.1} parent=1 // loop_pre_header
      _
    $region3: #{tpu_custom_call.1} parent=1 // loop_header
      %s15 = sphi 0, %s19
      %p16 = scmp.ge.s32.totalorder %s15, 4
      %s22 = sphi 0, %s41
      %s23 = sphi 0, %s37
      %s24 = sphi 0, %s33
      %s25 = sphi 0, %s22
      %s26 = sphi 0, %s23
      %s27 = sphi 0, %s24
      %s28 = sphi 0, %s25
      %s29 = sphi 0, %s26
      %s30 = sphi 0, %s27
      %s56 = sphi 0, %s58
      %s59 = sphi 0, %s56
      %s60 = sphi 0, %s59
      %s76 = sphi 0, %s60
      %s82 = sphi 0, %s84
      %s85 = sphi 0, %s82
      %s86 = sphi 0, %s85
      %s102 = sphi 0, %s86
      %s108 = sphi 0, %s110
      %s111 = sphi 0, %s108
      %s112 = sphi 0, %s111
      %s128 = sphi 0, %s112
      %s140 = sphi 0, %s142
      %s143 = sphi 0, %s140
      %s144 = sphi 0, %s143
      %s160 = sphi 0, %s144
    $region4: #{tpu_custom_call.1} parent=1 // loop_header_branch
      %18 = sbr.rel (%p16) target = $region8
    $region5: #{tpu_custom_call.1} parent=1 // loop_body
      %s20 = ssub.s32 %s15, 1
      %s21 = ssub.s32 %s15, 2
      %s31 = sadd.s32 1, %s24
      %p32 = scmp.ge.s32.totalorder %s31, 1
      %s33 = scalar_select %p32, 0, %s31
      %s34 = sadd.s32 1, %s23
      %s35 = scalar_select %p32, %s34, %s23
      %p36 = scmp.ge.s32.totalorder %s35, 2
      %s37 = scalar_select %p36, 0, %s35
      %s38 = sadd.s32 1, %s22
      %s39 = scalar_select %p36, %s38, %s22
      %p40 = scmp.ge.s32.totalorder %s39, 1
      %s41 = scalar_select %p40, 0, %s39
      %s42 = ssub.s32 1, %s23
      %s43 = smul.u32 %s24, %s42
      %s44 = ssub.s32 0, %s24
      %s45 = smul.u32 %s44, %s23
      %s46 = sadd.s32 %s43, %s45
      %s47 = ssub.s32 1, %s37
      %s48 = smul.u32 %s33, %s47
      %s49 = ssub.s32 0, %s33
      %s50 = smul.u32 %s49, %s37
      %s51 = sadd.s32 %s48, %s50
      %s52 = ssub.s32 %s22, %s41
      %s53 = ssub.s32 %s46, %s51
      %s54 = sor.u32 %s52, %s53
      %p55 = scmp.eq.s32.totalorder %s54, 0
      %s57 = sadd.s32 %s56, 1
      %s58 = scalar_select %p55, %s56, %s57
      %p61 = pneg %p55
      %p62 = scmp.eq.s32.totalorder %s15, 1
      %p63 = por %p61, %p62
      %p64 = scmp.ne.s32.totalorder %s56, %s59
      %p65 = scmp.eq.s32.totalorder %s15, 0
      %p66 = por %p64, %p65
      %p67 = scmp.ne.s32.totalorder %s56, %s59
      %p68 = scmp.eq.s32.totalorder %s20, 1
      %p69 = por %p67, %p68
      %p70 = scmp.ne.s32.totalorder %s59, %s60
      %p71 = scmp.eq.s32.totalorder %s20, 0
      %p72 = por %p70, %p71
      %p73 = scmp.ne.s32.totalorder %s59, %s60
      %p74 = scmp.eq.s32.totalorder %s21, 1
      %p75 = por %p73, %p74
      %p77 = scmp.ne.s32.totalorder %s60, %s76
      %p78 = scmp.eq.s32.totalorder %s21, 0
      %p79 = por %p77, %p78
      %s80 = ssub.s32 %s22, %s41
      %p81 = scmp.eq.s32.totalorder %s80, 0
      %s83 = sadd.s32 %s82, 1
      %s84 = scalar_select %p81, %s82, %s83
      %p87 = pneg %p81
      %p88 = scmp.eq.s32.totalorder %s15, 1
      %p89 = por %p87, %p88
      %p90 = scmp.ne.s32.totalorder %s82, %s85
      %p91 = scmp.eq.s32.totalorder %s15, 0
      %p92 = por %p90, %p91
      %p93 = scmp.ne.s32.totalorder %s82, %s85
      %p94 = scmp.eq.s32.totalorder %s20, 1
      %p95 = por %p93, %p94
      %p96 = scmp.ne.s32.totalorder %s85, %s86
      %p97 = scmp.eq.s32.totalorder %s20, 0
      %p98 = por %p96, %p97
      %p99 = scmp.ne.s32.totalorder %s85, %s86
      %p100 = scmp.eq.s32.totalorder %s21, 1
      %p101 = por %p99, %p100
      %p103 = scmp.ne.s32.totalorder %s86, %s102
      %p104 = scmp.eq.s32.totalorder %s21, 0
      %p105 = por %p103, %p104
      %s106 = ssub.s32 %s22, %s41
      %p107 = scmp.eq.s32.totalorder %s106, 0
      %s109 = sadd.s32 %s108, 1
      %s110 = scalar_select %p107, %s108, %s109
      %p113 = pneg %p107
      %p114 = scmp.eq.s32.totalorder %s15, 1
      %p115 = por %p113, %p114
      %p116 = scmp.ne.s32.totalorder %s108, %s111
      %p117 = scmp.eq.s32.totalorder %s15, 0
      %p118 = por %p116, %p117
      %p119 = scmp.ne.s32.totalorder %s108, %s111
      %p120 = scmp.eq.s32.totalorder %s20, 1
      %p121 = por %p119, %p120
      %p122 = scmp.ne.s32.totalorder %s111, %s112
      %p123 = scmp.eq.s32.totalorder %s20, 0
      %p124 = por %p122, %p123
      %p125 = scmp.ne.s32.totalorder %s111, %s112
      %p126 = scmp.eq.s32.totalorder %s21, 1
      %p127 = por %p125, %p126
      %p129 = scmp.ne.s32.totalorder %s112, %s128
      %p130 = scmp.eq.s32.totalorder %s21, 0
      %p131 = por %p129, %p130
      %s132 = smul.u32 %s24, %s23
      %s133 = ssub.s32 0, %s132
      %s134 = smul.u32 %s33, %s37
      %s135 = ssub.s32 0, %s134
      %s136 = ssub.s32 %s22, %s41
      %s137 = ssub.s32 %s133, %s135
      %s138 = sor.u32 %s136, %s137
      %p139 = scmp.eq.s32.totalorder %s138, 0
      %s141 = sadd.s32 %s140, 1
      %s142 = scalar_select %p139, %s140, %s141
      %p145 = pneg %p139
      %p146 = scmp.eq.s32.totalorder %s15, 1
      %p147 = por %p145, %p146
      %p148 = scmp.ne.s32.totalorder %s140, %s143
      %p149 = scmp.eq.s32.totalorder %s15, 0
      %p150 = por %p148, %p149
      %p151 = scmp.ne.s32.totalorder %s140, %s143
      %p152 = scmp.eq.s32.totalorder %s20, 1
      %p153 = por %p151, %p152
      %p154 = scmp.ne.s32.totalorder %s143, %s144
      %p155 = scmp.eq.s32.totalorder %s20, 0
      %p156 = por %p154, %p155
      %p157 = scmp.ne.s32.totalorder %s143, %s144
      %p158 = scmp.eq.s32.totalorder %s21, 1
      %p159 = por %p157, %p158
      %p161 = scmp.ne.s32.totalorder %s144, %s160
      %p162 = scmp.eq.s32.totalorder %s21, 0
      %p163 = por %p161, %p162
      %p164 = scmp.le.s32.totalorder 1, %s15
      %p165 = scmp.lt.s32.totalorder %s15, 3
      %p166 = pnand %p164, %p165
      %p167 = pneg %p166
      // Predicated region
      $region9: #{tpu_custom_call.1} parent=5 // pred_check
        _
      $region10: #{tpu_custom_call.1} parent=5 // pred_check_branch
        %169 = sbr.rel (%p166) target = $region12
      $region11: #{tpu_custom_call.1} parent=5 // pred_region
        %s170 = ssub.s32 %s15, 1
        // Predicated region
        $region13: #{tpu_custom_call.1} parent=11 // pred_check
          %p171 = pneg %p98
        $region14: #{tpu_custom_call.1} parent=11 // pred_check_branch
          %173 = sbr.rel (%p171) target = $region16
        $region15: #{tpu_custom_call.1} parent=11 // pred_region
          %p174 = scmp.lt.s32.totalorder %s25, 0
          %s175 = scalar_select %p174, %s25, 0
          %s176 = smul.addr %s175, 4
          %s177 = scalar_lea.vmem %s1, %s176
        $region16: #{tpu_custom_call.1} parent=11 // pred_fallthru
          _
        // Predicated region
        $region17: #{tpu_custom_call.1} parent=11 // pred_check
          %p178 = pneg %p124
        $region18: #{tpu_custom_call.1} parent=11 // pred_check_branch
          %180 = sbr.rel (%p178) target = $region20
        $region19: #{tpu_custom_call.1} parent=11 // pred_region
          %p181 = scmp.lt.s32.totalorder %s25, 0
          %s182 = scalar_select %p181, %s25, 0
          %s183 = smul.addr %s182, 4
          %s184 = scalar_lea.vmem %s2, %s183
        $region20: #{tpu_custom_call.1} parent=11 // pred_fallthru
          _
      $region12: #{tpu_custom_call.1} parent=5 // pred_fallthru
        _
      %p185 = scmp.lt.s32.totalorder %s15, 2
      // Predicated region
      $region21: #{tpu_custom_call.1} parent=5 // pred_check
        %p186 = pneg %p185
      $region22: #{tpu_custom_call.1} parent=5 // pred_check_branch
        %188 = sbr.rel (%p186) target = $region24
      $region23: #{tpu_custom_call.1} parent=5 // pred_region
        // Predicated region
        $region25: #{tpu_custom_call.1} parent=23 // pred_check
          %p189 = pneg %p66
        $region26: #{tpu_custom_call.1} parent=23 // pred_check_branch
          %191 = sbr.rel (%p189) target = $region28
        $region27: #{tpu_custom_call.1} parent=23 // pred_region
          %s192 = sand.u32 %s56, 1
          %s193 = scalar_lea.sflag [#allocation7], %s192
          %s194 = sand.u32 %s56, 1
          %s195 = smul.addr %s194, 16
          %s196 = scalar_lea.vmem [#allocation6], %s195
          %s197 = ssub.s32 1, %s23
          %s198 = smul.u32 %s24, %s197
          %s199 = ssub.s32 0, %s24
          %s200 = smul.u32 %s199, %s23
          %s201 = sadd.s32 %s198, %s200
          %s202 = smul.u32 2, %s201
          %s204 = ssub.s32 256, 256
          %205 = vsyncadd %s193, %s204
          %s206 = smul.addr %s22, 2
          %s207 = sadd.s32 %s202, %s206
          %s208 = smul.addr %s207, 64
          %s209 = scalar_lea.hbm %s0, %s208
          %s210 = sshll.u32 %s196, 4
          %s211 = int_to_ptr.vmem [resolvable:$true] %s210
          %216 = dma.hbm_to_vmem [thread:$0]  %s209, 256, %s211, %s193, 128, 128, 8
        $region28: #{tpu_custom_call.1} parent=23 // pred_fallthru
          _
      $region24: #{tpu_custom_call.1} parent=5 // pred_fallthru
        _
      %p217 = scmp.le.s32.totalorder 1, %s15
      %p218 = scmp.lt.s32.totalorder %s15, 3
      %p219 = pnand %p217, %p218
      %p220 = pneg %p219
      // Predicated region
      $region29: #{tpu_custom_call.1} parent=5 // pred_check
        _
      $region30: #{tpu_custom_call.1} parent=5 // pred_check_branch
        %222 = sbr.rel (%p219) target = $region32
      $region31: #{tpu_custom_call.1} parent=5 // pred_region
        %s223 = ssub.s32 %s15, 1
        %s224 = sand.u32 %s59, 1
        %s225 = scalar_lea.sflag [#allocation7], %s224
        %s226 = sand.u32 %s59, 1
        %s227 = smul.addr %s226, 16
        %s228 = scalar_lea.vmem [#allocation6], %s227
        // Predicated region
        $region33: #{tpu_custom_call.1} parent=31 // pred_check
          %p229 = pneg %p72
        $region34: #{tpu_custom_call.1} parent=31 // pred_check_branch
          %231 = sbr.rel (%p229) target = $region36
        $region35: #{tpu_custom_call.1} parent=31 // pred_region
          %232 = dma.done %s225, 256
        $region36: #{tpu_custom_call.1} parent=31 // pred_fallthru
          _
        %s233 = sand.u32 %s59, 1
        %s234 = scalar_lea.sflag [#allocation7], %s233
        %s235 = sand.u32 %s59, 1
        %s236 = smul.addr %s235, 16
        %s237 = scalar_lea.vmem [#allocation6], %s236
        %p238 = pneg %p72
        %p239 = pneg %p69
        %p240 = scmp.lt.s32.totalorder %s25, 0
        %s241 = scalar_select %p240, %s25, 0
        %s242 = smul.addr %s241, 4
        %s243 = scalar_lea.vmem %s1, %s242
        %p244 = pneg %p98
        %p245 = pneg %p95
        %p246 = scmp.lt.s32.totalorder %s25, 0
        %s247 = scalar_select %p246, %s25, 0
        %s248 = smul.addr %s247, 4
        %s249 = scalar_lea.vmem %s2, %s248
        %p250 = pneg %p124
        %p251 = pneg %p121
        %p252 = pneg %p156
        %p253 = pneg %p153
        %s254 = sand.u32 %s143, 1
        %s255 = scalar_lea.sflag [#allocation8], %s254
        %s256 = sand.u32 %s143, 1
        %s257 = smul.addr %s256, 16
        %s258 = scalar_lea.vmem [#allocation9], %s257
        %s259 = ssub.s32 1, %s26
        %s260 = smul.u32 %s27, %s259
        %s261 = ssub.s32 0, %s27
        %s262 = smul.u32 %s261, %s26
        %s263 = sadd.s32 %s260, %s262
        %s264 = smul.u32 2, %s263
        %p265 = scmp.lt.s32.totalorder %s25, 0
        %s266 = scalar_select %p265, %s25, 0
        %s267 = smul.addr %s266, 4
        %s268 = scalar_lea.vmem %s1, %s267
        %p269 = scmp.lt.s32.totalorder %s25, 0
        %s270 = scalar_select %p269, %s25, 0
        %s271 = smul.addr %s270, 4
        %s272 = scalar_lea.vmem %s2, %s271
        %s273 = smul.u32 %s27, %s26
        %s274 = ssub.s32 0, %s273
        %s275 = smul.u32 2, %s274
        %p276 = scmp.eq.s32.totalorder %s26, 0
        %p277 = scmp.eq.s32.totalorder %s27, 0
        %p278 = pnand %p276, %p277
        %p279 = pneg %p278
        // Predicated region
        $region37: #{tpu_custom_call.1} parent=31 // pred_check
          _
        $region38: #{tpu_custom_call.1} parent=31 // pred_check_branch
          %281 = sbr.rel (%p278) target = $region40
        $region39: #{tpu_custom_call.1} parent=31 // pred_region
          %vm282 = vcmask 3072
          %283 = vst.msk [vmem:[#allocation2] sm:$0xf] %vm282, 0.0
          %284 = vst.msk [vmem:[#allocation3] sm:$0xf] %vm282, 0.0
        $region40: #{tpu_custom_call.1} parent=31 // pred_fallthru
          _
        // Predicated region
        $region41: #{tpu_custom_call.1} parent=31 // pred_check
          %p285 = pneg %p276
        $region42: #{tpu_custom_call.1} parent=31 // pred_check_branch
          %287 = sbr.rel (%p285) target = $region44
        $region43: #{tpu_custom_call.1} parent=31 // pred_region
          %v288 = vld [vmem:[%s228] sm:$0xff]
          %v289 = vld [vmem:[%s228 + $0x8] sm:$0xff]
          %v292 = vcombine.high %v288, %v288
          %v293 = vcombine.high %v289, %v289
          %vm296 = vcmask 1043456
          %v297 = vsel %vm296, %v288, 0.0
          %v298 = vsel %vm296, %v292, 0.0
          %v299 = vadd.f32 %v297, %v298
          %300 = vadd.xlane.f32.xlu0 %v299
          %v301 = vpop.xlane.xlu0 %300
          %v302 = vsel %vm296, %v289, 0.0
          %v303 = vsel %vm296, %v293, 0.0
          %v304 = vadd.f32 %v302, %v303
          %305 = vadd.xlane.f32.xlu0 %v304
          %v306 = vpop.xlane.xlu0 %305
          %v307 = vmul.f32 %v288, %v288
          %v308 = vmul.f32 %v289, %v289
          %v311 = vcombine.high %v307, %v307
          %v312 = vcombine.high %v308, %v308
          %v315 = vsel %vm296, %v307, 0.0
          %v316 = vsel %vm296, %v311, 0.0
          %v317 = vadd.f32 %v315, %v316
          %318 = vadd.xlane.f32.xlu0 %v317
          %v319 = vpop.xlane.xlu0 %318
          %v320 = vsel %vm296, %v308, 0.0
          %v321 = vsel %vm296, %v312, 0.0
          %v322 = vadd.f32 %v320, %v321
          %323 = vadd.xlane.f32.xlu0 %v322
          %v324 = vpop.xlane.xlu0 %323
          %v325 = vld [vmem:[#allocation2] sm:$0xf]
          %v326 = vsel %vm296, %v301, 0.0
          %v327 = vsel %vm296, %v306, 0.0
          %v328 = vadd.f32 %v326, %v327
          %v329 = vadd.f32 %v325, %v328
          %vm330 = vcmask 3072
          %331 = vst.msk [vmem:[#allocation2] sm:$0xf] %vm330, %v329
          %v332 = vld [vmem:[#allocation3] sm:$0xf]
          %v333 = vsel %vm296, %v319, 0.0
          %v334 = vsel %vm296, %v324, 0.0
          %v335 = vadd.f32 %v333, %v334
          %v336 = vadd.f32 %v332, %v335
          %337 = vst.msk [vmem:[#allocation3] sm:$0xf] %vm330, %v336
        $region44: #{tpu_custom_call.1} parent=31 // pred_fallthru
          _
        %p338 = scmp.eq.s32.totalorder %s26, 1
        %p339 = pnand %p338, %p277
        %p340 = pneg %p339
        // Predicated region
        $region45: #{tpu_custom_call.1} parent=31 // pred_check
          _
        $region46: #{tpu_custom_call.1} parent=31 // pred_check_branch
          %342 = sbr.rel (%p339) target = $region48
        $region47: #{tpu_custom_call.1} parent=31 // pred_region
          %v343 = vld [vmem:[#allocation2] sm:$0xf]
          %v344 = vmul.f32 %v343, 0.001953125
          %v345 = vld [vmem:[#allocation3] sm:$0xf]
          %v346 = vmul.f32 %v345, 0.001953125
          %v347 = vmul.f32 %v344, %v344
          %v348 = vsub.f32 %v346, %v347
          %v349 = vmax.f32 %v348, 0.0
          %vm350 = vcmask 3072
          %351 = vst.msk [vmem:[#allocation4] sm:$0xf] %vm350, %v344
          %v352 = vadd.f32 %v349, 1e-05
          %v353 = vrsqrt.pop %v352
          %354 = vst.msk [vmem:[#allocation5] sm:$0xf] %vm350, %v353
        $region48: #{tpu_custom_call.1} parent=31 // pred_fallthru
          _
        // Predicated region
        $region49: #{tpu_custom_call.1} parent=31 // pred_check
          %p355 = pneg %p338
        $region50: #{tpu_custom_call.1} parent=31 // pred_check_branch
          %357 = sbr.rel (%p355) target = $region52
        $region51: #{tpu_custom_call.1} parent=31 // pred_region
          %v358 = vld [vmem:[%s268] sm:$0xf]
          %v359 = vld [vmem:[%s268 + $0x4] sm:$0xf]
          %v360 = vld [vmem:[%s272] sm:$0xf]
          %v361 = vld [vmem:[%s272 + $0x4] sm:$0xf]
          %v362 = vld [vmem:[#allocation5] sm:$0xf]
          %v363 = vmul.f32 %v358, %v362
          %v364 = vmul.f32 %v359, %v362
          %v365 = vld [vmem:[#allocation4] sm:$0xf]
          %v366 = vmul.f32 %v365, %v363
          %v367 = vmul.f32 %v365, %v364
          %v368 = vsub.f32 %v360, %v366
          %v369 = vsub.f32 %v361, %v367
          %v370 = vld [vmem:[%s228] sm:$0xff]
          %v371 = vld [vmem:[%s228 + $0x8] sm:$0xff]
          %373 = vset.pattern.permute.xlu0 0
          %374 = vperm.xlu0 %373, %v363
          %v375 = vpop.permute.xlu0 %374
          %377 = vset.pattern.permute.xlu0 0
          %378 = vperm.xlu0 %377, %v364
          %v379 = vpop.permute.xlu0 %378
          %v381 = vunpack.c.l.s4 839922192
          %v382 = vunpack.c.0.s8 %v381
          %v383 = vlaneseq
          %v384 = vshrl.u32 %v383, 7
          %v385 = vsub.s32 %v382, %v384
          %v386 = vrot.slane %v375, %v385
          %v388 = vunpack.c.l.s4 839922192
          %v389 = vunpack.c.0.s8 %v388
          %v390 = vlaneseq
          %v391 = vshrl.u32 %v390, 7
          %v392 = vsub.s32 %v389, %v391
          %v393 = vrot.slane %v379, %v392
          %v396 = vmul.f32 %v370, %v386
          %v397 = vmul.f32 %v371, %v393
          %399 = vset.pattern.permute.xlu0 0
          %400 = vperm.xlu0 %399, %v368
          %v401 = vpop.permute.xlu0 %400
          %403 = vset.pattern.permute.xlu0 0
          %404 = vperm.xlu0 %403, %v369
          %v405 = vpop.permute.xlu0 %404
          %v407 = vunpack.c.l.s4 839922192
          %v408 = vunpack.c.0.s8 %v407
          %v409 = vlaneseq
          %v410 = vshrl.u32 %v409, 7
          %v411 = vsub.s32 %v408, %v410
          %v412 = vrot.slane %v401, %v411
          %v414 = vunpack.c.l.s4 839922192
          %v415 = vunpack.c.0.s8 %v414
          %v416 = vlaneseq
          %v417 = vshrl.u32 %v416, 7
          %v418 = vsub.s32 %v415, %v417
          %v419 = vrot.slane %v405, %v418
          %v422 = vadd.f32 %v396, %v412
          %v423 = vadd.f32 %v397, %v419
          %424 = vst [vmem:[%s258] sm:$0xff] %v422
          %425 = vst [vmem:[%s258 + $0x8] sm:$0xff] %v423
        $region52: #{tpu_custom_call.1} parent=31 // pred_fallthru
          _
        %s426 = sand.u32 %s143, 1
        %s427 = scalar_lea.sflag [#allocation8], %s426
        %s428 = sand.u32 %s143, 1
        %s429 = smul.addr %s428, 16
        %s430 = scalar_lea.vmem [#allocation9], %s429
        // Predicated region
        $region53: #{tpu_custom_call.1} parent=31 // pred_check
          %p431 = pneg %p153
        $region54: #{tpu_custom_call.1} parent=31 // pred_check_branch
          %433 = sbr.rel (%p431) target = $region56
        $region55: #{tpu_custom_call.1} parent=31 // pred_region
          %s434 = smul.u32 %s27, %s26
          %s435 = ssub.s32 0, %s434
          %s436 = smul.u32 2, %s435
          %s438 = ssub.s32 256, 256
          %439 = vsyncadd %s427, %s438
          %s440 = smul.addr %s25, 2
          %s441 = sadd.s32 %s436, %s440
          %s442 = smul.addr %s441, 64
          %s443 = scalar_lea.hbm %s3, %s442
          %s444 = sshll.u32 %s430, 4
          %s445 = int_to_ptr.vmem [resolvable:$true] %s444
          %450 = dma.vmem_to_hbm [thread:$0]  %s445, 256, %s443, %s427, 128, 128, 8
        $region56: #{tpu_custom_call.1} parent=31 // pred_fallthru
          _
      $region32: #{tpu_custom_call.1} parent=5 // pred_fallthru
        _
      %p451 = scmp.le.s32.totalorder 2, %s15
      // Predicated region
      $region57: #{tpu_custom_call.1} parent=5 // pred_check
        %p452 = pneg %p451
      $region58: #{tpu_custom_call.1} parent=5 // pred_check_branch
        %454 = sbr.rel (%p452) target = $region60
      $region59: #{tpu_custom_call.1} parent=5 // pred_region
        %s455 = ssub.s32 %s15, 2
        // Predicated region
        $region61: #{tpu_custom_call.1} parent=59 // pred_check
          %p456 = pneg %p159
        $region62: #{tpu_custom_call.1} parent=59 // pred_check_branch
          %458 = sbr.rel (%p456) target = $region64
        $region63: #{tpu_custom_call.1} parent=59 // pred_region
          %s459 = sand.u32 %s144, 1
          %s460 = scalar_lea.sflag [#allocation8], %s459
          %s461 = sand.u32 %s144, 1
          %s462 = smul.addr %s461, 16
          %s463 = scalar_lea.vmem [#allocation9], %s462
          %464 = dma.done %s460, 256
        $region64: #{tpu_custom_call.1} parent=59 // pred_fallthru
          _
      $region60: #{tpu_custom_call.1} parent=5 // pred_fallthru
        _
    $region6: #{tpu_custom_call.1} parent=1 // loop_footer
      %s19 = sadd.s32 1, %s15
    $region7: #{tpu_custom_call.1} parent=1 // loop_footer_branch
      %14 = sbr.rel target = $region3
    $region8: #{tpu_custom_call.1} parent=1 // loop_exit
      _
    %465 = vsyncpa [#allocation7], 1
    %s466 = scalar_lea.sflag [#allocation7], 1
    %467 = vsyncpa %s466, 1
    %468 = vsyncpa [#allocation8], 1
    %s469 = scalar_lea.sflag [#allocation8], 1
    %470 = vsyncpa %s469, 1

</llo_original>
